<compile_context>
chip_gen: v7x
topology: tpu7x:2x2x1
jax: 0.10.0
libtpu: 0.0.40
codegen_flags: <defaults>
</compile_context>

<pallas_src>
import jax
import jax.numpy as jnp
from jax.experimental import pallas as pl
from jax.experimental.pallas import tpu as pltpu

EPS = 1e-10


def _cmvn_kernel(x_ref, o_ref):
    # x_ref block: (BC_TILE, T, F) in VMEM; reduce over T (sublane axis).
    x = x_ref[...].astype(jnp.float32)
    n = x.shape[1]
    mean = jnp.mean(x, axis=1, keepdims=True)               # (BC_TILE, 1, F)
    diff = x - mean                                          # reused below (no recompute)
    # Unbiased variance (Bessel correction) matching torch.std default.
    # (Computed in jnp so T == 1 yields inf/nan exactly like torch, not a trace error.)
    var = jnp.sum(diff * diff, axis=1, keepdims=True) / jnp.float32(n - 1)
    # One reciprocal per (slab, feature) instead of T*F divides, then a broadcast VPU multiply.
    inv = pl.reciprocal(jnp.float32(EPS) + jnp.sqrt(var), approx=False)  # (BC_TILE, 1, F)
    o_ref[...] = (diff * inv).astype(o_ref.dtype)


def _pick_bc_tile(bc, t, f, target_bytes=2 * 1024 * 1024):
    """How many (T, F) slabs to process per grid step.

    Targets ~2 MiB f32 input blocks (lane/sublane padded), prefers >= 2 grid
    steps (megacore), and prefers an exact divisor of bc when one is close to
    the cap so the last block is not ragged; otherwise falls back to a
    ceil-div grid with a padded last block.
    """
    f_pad = ((f + 127) // 128) * 128            # lanes pad to 128
    t_pad = ((t + 7) // 8) * 8                  # sublanes pad to 8
    slab_bytes = t_pad * f_pad * 4              # one (T, F) slab in f32 (VMEM footprint)
    cap = max(1, min(bc, target_bytes // max(slab_bytes, 1)))
    if cap >= bc and bc >= 2:                   # ensure >= 2 grid steps for 2 TensorCores
        cap = (bc + 1) // 2
    best_div = 1
    for d in range(cap, 0, -1):                 # largest divisor of bc not above the cap
        if bc % d == 0:
            best_div = d
            break
    if best_div * 2 >= cap:                     # close enough -> keep grid non-ragged
        return best_div
    return cap                                  # ragged last block (Pallas pads/masks it)


def cmvn(x):
    """Global CMVN over axis 2 of a (B, C, T, F) array."""
    B, C, T, F = x.shape
    BC = B * C
    xf = x.reshape(BC, T, F)                    # free reshape (contiguous)

    bc_tile = _pick_bc_tile(BC, T, F)
    grid = (pl.cdiv(BC, bc_tile),)

    out = pl.pallas_call(
        _cmvn_kernel,
        out_shape=jax.ShapeDtypeStruct((BC, T, F), x.dtype),
        grid_spec=pltpu.PrefetchScalarGridSpec(
            num_scalar_prefetch=0,
            grid=grid,
            in_specs=[pl.BlockSpec((bc_tile, T, F), lambda i: (i, 0, 0))],
            out_specs=pl.BlockSpec((bc_tile, T, F), lambda i: (i, 0, 0)),
        ),
        compiler_params=pltpu.CompilerParams(
            dimension_semantics=("parallel",),
        ),
    )(xf)

    return out.reshape(B, C, T, F)


def _cmvn_ref(x):
    # pure-JAX reference matching torch semantics (unbiased std)
    mean = jnp.mean(x, axis=2, keepdims=True)
    var = jnp.sum((x - mean) ** 2, axis=2, keepdims=True) / (x.shape[2] - 1)
    std = jnp.sqrt(var)
    return (x - mean) / (EPS + std)


if __name__ == "__main__":
    key = jax.random.PRNGKey(0)

    # Primary test: small shape consistent with the module (batch, channel, norm_axis, feat).
    x = jax.random.normal(key, (2, 4, 16, 16), dtype=jnp.float32)
    y = cmvn(x)
    jax.block_until_ready(y)
    y_ref = _cmvn_ref(x)
    assert y.shape == x.shape and y.dtype == x.dtype
    assert jnp.allclose(y, y_ref, atol=1e-5, rtol=1e-5)

    # Secondary check: B*C with no nice divisor -> exercises the ragged-last-block path.
    x2 = jax.random.normal(jax.random.PRNGKey(1), (13, 1, 16, 16), dtype=jnp.float32)
    y2 = cmvn(x2)
    jax.block_until_ready(y2)
    assert jnp.allclose(y2, _cmvn_ref(x2), atol=1e-5, rtol=1e-5)

    print("KERNEL_OK")
</pallas_src>

<mosaic_0001>
module attributes {stable_mosaic.version = 11 : i64} {
  func.func @_cmvn_kernel(%arg0: i32, %arg1: memref<4x16x16xf32, #tpu.memory_space<vmem>>, %arg2: memref<4x16x16xf32, #tpu.memory_space<vmem>>) attributes {dimension_semantics = [#tpu.dimension_semantics<parallel>], iteration_bounds = array<i64: 2>, scalar_prefetch = 0 : i64, scratch_operands = 0 : i64, tpu.core_type = #tpu.core_type<tc>, window_params = [{transform_indices = @transform_0, window_bounds = array<i64: 4, 16, 16>}, {transform_indices = @transform_1, window_bounds = array<i64: 4, 16, 16>}]} {
    %c0 = arith.constant 0 : index
    %c0_0 = arith.constant 0 : index
    %c0_1 = arith.constant 0 : index
    %0 = vector.load %arg1[%c0, %c0_0, %c0_1] : memref<4x16x16xf32, #tpu.memory_space<vmem>>, vector<4x16x16xf32>
    %cst = arith.constant dense<0.000000e+00> : vector<4x16xf32>
    %1 = vector.multi_reduction <add>, %0, %cst [1] : vector<4x16x16xf32> to vector<4x16xf32>
    %2 = vector.shape_cast %1 : vector<4x16xf32> to vector<4x1x16xf32>
    %cst_2 = arith.constant 1.600000e+01 : f32
    %3 = vector.broadcast %cst_2 : f32 to vector<4x1x16xf32>
    %4 = arith.divf %2, %3 : vector<4x1x16xf32>
    %5 = vector.broadcast %4 : vector<4x1x16xf32> to vector<4x16x16xf32>
    %6 = arith.subf %0, %5 : vector<4x16x16xf32>
    %7 = arith.mulf %6, %6 : vector<4x16x16xf32>
    %cst_3 = arith.constant dense<0.000000e+00> : vector<4x16xf32>
    %8 = vector.multi_reduction <add>, %7, %cst_3 [1] : vector<4x16x16xf32> to vector<4x16xf32>
    %9 = vector.shape_cast %8 : vector<4x16xf32> to vector<4x1x16xf32>
    %cst_4 = arith.constant 1.500000e+01 : f32
    %10 = vector.broadcast %cst_4 : f32 to vector<4x1x16xf32>
    %11 = arith.divf %9, %10 : vector<4x1x16xf32>
    %12 = math.sqrt %11 : vector<4x1x16xf32>
    %cst_5 = arith.constant 1.000000e-10 : f32
    %13 = vector.broadcast %cst_5 : f32 to vector<4x1x16xf32>
    %14 = arith.addf %13, %12 : vector<4x1x16xf32>
    %15 = tpu.reciprocal %14 : vector<4x1x16xf32> -> vector<4x1x16xf32>
    %16 = vector.broadcast %15 : vector<4x1x16xf32> to vector<4x16x16xf32>
    %17 = arith.mulf %6, %16 : vector<4x16x16xf32>
    %c0_6 = arith.constant 0 : index
    %c0_7 = arith.constant 0 : index
    %c0_8 = arith.constant 0 : index
    %18 = vector.load %arg2[%c0_6, %c0_7, %c0_8] : memref<4x16x16xf32, #tpu.memory_space<vmem>>, vector<4x16x16xf32>
    tpu.vector_store %arg2[%c0_6, %c0_7, %c0_8], %17 {strides = array<i32>} : memref<4x16x16xf32, #tpu.memory_space<vmem>>, vector<4x16x16xf32>,
    return
  }
  func.func @transform_0(%arg0: i32) -> (i32, i32, i32) {
    %c0_i32 = arith.constant 0 : i32
    %c0_i32_0 = arith.constant 0 : i32
    %c0_i32_1 = arith.constant 0 : i32
    return %arg0, %c0_i32, %c0_i32_0 : i32, i32, i32
  }
  func.func @transform_1(%arg0: i32) -> (i32, i32, i32) {
    %c0_i32 = arith.constant 0 : i32
    %c0_i32_0 = arith.constant 0 : i32
    %c0_i32_1 = arith.constant 0 : i32
    return %arg0, %c0_i32, %c0_i32_0 : i32, i32, i32
  }
}

</mosaic_0001>

<llo_original>
// kernel: tpu_custom_call.1
$region0: #{tpu_custom_call.1}
  #allocation0 [shape = 'u32[]', space=smem, size = 0x4, offset = 0x4, fixed_abs, tag = 'smem constant byte address 0x4 - core index']
  #allocation1 [shape = 'u32[144,128]{1,0:T(1,128)}', space=vmem, size = 0x12000, scoped, tag = 'internal scratch']
  %s0 = inlined_call_operand.hbm [shape: f32[8,16,16], index: 0, kind: input, shape index: {}]
  %s1 = inlined_call_operand.hbm [shape: f32[8,16,16], index: 1, kind: output, shape index: {}]
  %s2 = sld [smem:[#allocation0]]
  $region41: #{tpu_custom_call.1} parent=0
    _
  %s4 = ssub.s32 1, %s2
  %s5 = scalar_select 0, %s4, %s2
  $region1: #{tpu_custom_call.1} parent=0
    #allocation2 [shape = 'u8[65536]{0}', space=vmem, size = 0x10000, scoped, tag = 'input window, operand 0']
    #allocation3 [shape = 's32[2]{0}', space=sflag, size = 0x8, scoped, tag = 'scoped memory for tpu_custom_call.1']
    #allocation4 [shape = 's32[2]{0}', space=sflag, size = 0x8, scoped, tag = 'scoped memory for tpu_custom_call.1']
    #allocation5 [shape = 'u8[65536]{0}', space=vmem, size = 0x10000, scoped, tag = 'output window, operand 0']
    %6 = vsyncpa [#allocation3], 0
    %s7 = scalar_lea.sflag [#allocation3], 1
    %8 = vsyncpa %s7, 0
    %9 = vsyncpa [#allocation4], 0
    %s10 = scalar_lea.sflag [#allocation4], 1
    %11 = vsyncpa %s10, 0
    loop: start=0, step=1, limit=4
    $region2: #{tpu_custom_call.1} parent=1 // loop_pre_header
      _
    $region3: #{tpu_custom_call.1} parent=1 // loop_header
      %s13 = sphi 0, %s17
      %p14 = scmp.ge.s32.totalorder %s13, 4
      %s23 = sphi 0, %s25
      %s26 = sphi 0, %s23
      %s27 = sphi 0, %s26
      %s43 = sphi 0, %s27
      %s49 = sphi 0, %s51
      %s52 = sphi 0, %s49
      %s53 = sphi 0, %s52
      %s69 = sphi 0, %s53
    $region4: #{tpu_custom_call.1} parent=1 // loop_header_branch
      %16 = sbr.rel (%p14) target = $region8
    $region5: #{tpu_custom_call.1} parent=1 // loop_body
      %s18 = ssub.s32 %s13, 1
      %s19 = ssub.s32 %s13, 2
      %s20 = sadd.s32 %s13, 1
      %s21 = ssub.s32 %s13, %s20
      %p22 = scmp.eq.s32.totalorder %s21, 0
      %s24 = sadd.s32 %s23, 1
      %s25 = scalar_select %p22, %s23, %s24
      %p28 = pneg %p22
      %p29 = scmp.eq.s32.totalorder %s13, 1
      %p30 = por %p28, %p29
      %p31 = scmp.ne.s32.totalorder %s23, %s26
      %p32 = scmp.eq.s32.totalorder %s13, 0
      %p33 = por %p31, %p32
      %p34 = scmp.ne.s32.totalorder %s23, %s26
      %p35 = scmp.eq.s32.totalorder %s18, 1
      %p36 = por %p34, %p35
      %p37 = scmp.ne.s32.totalorder %s26, %s27
      %p38 = scmp.eq.s32.totalorder %s18, 0
      %p39 = por %p37, %p38
      %p40 = scmp.ne.s32.totalorder %s26, %s27
      %p41 = scmp.eq.s32.totalorder %s19, 1
      %p42 = por %p40, %p41
      %p44 = scmp.ne.s32.totalorder %s27, %s43
      %p45 = scmp.eq.s32.totalorder %s19, 0
      %p46 = por %p44, %p45
      %s47 = ssub.s32 %s13, %s20
      %p48 = scmp.eq.s32.totalorder %s47, 0
      %s50 = sadd.s32 %s49, 1
      %s51 = scalar_select %p48, %s49, %s50
      %p54 = pneg %p48
      %p55 = scmp.eq.s32.totalorder %s13, 1
      %p56 = por %p54, %p55
      %p57 = scmp.ne.s32.totalorder %s49, %s52
      %p58 = scmp.eq.s32.totalorder %s13, 0
      %p59 = por %p57, %p58
      %p60 = scmp.ne.s32.totalorder %s49, %s52
      %p61 = scmp.eq.s32.totalorder %s18, 1
      %p62 = por %p60, %p61
      %p63 = scmp.ne.s32.totalorder %s52, %s53
      %p64 = scmp.eq.s32.totalorder %s18, 0
      %p65 = por %p63, %p64
      %p66 = scmp.ne.s32.totalorder %s52, %s53
      %p67 = scmp.eq.s32.totalorder %s19, 1
      %p68 = por %p66, %p67
      %p70 = scmp.ne.s32.totalorder %s53, %s69
      %p71 = scmp.eq.s32.totalorder %s19, 0
      %p72 = por %p70, %p71
      %p73 = scmp.le.s32.totalorder 1, %s13
      %p74 = scmp.lt.s32.totalorder %s13, 3
      %p75 = pnand %p73, %p74
      %p76 = pneg %p75
      // Predicated region
      $region9: #{tpu_custom_call.1} parent=5 // pred_check
        _
      $region10: #{tpu_custom_call.1} parent=5 // pred_check_branch
        %78 = sbr.rel (%p75) target = $region12
      $region11: #{tpu_custom_call.1} parent=5 // pred_region
        %s79 = ssub.s32 %s13, 1
      $region12: #{tpu_custom_call.1} parent=5 // pred_fallthru
        _
      %p80 = scmp.lt.s32.totalorder %s13, 2
      // Predicated region
      $region13: #{tpu_custom_call.1} parent=5 // pred_check
        %p81 = pneg %p80
      $region14: #{tpu_custom_call.1} parent=5 // pred_check_branch
        %83 = sbr.rel (%p81) target = $region16
      $region15: #{tpu_custom_call.1} parent=5 // pred_region
        // Predicated region
        $region17: #{tpu_custom_call.1} parent=15 // pred_check
          %p84 = pneg %p33
        $region18: #{tpu_custom_call.1} parent=15 // pred_check_branch
          %86 = sbr.rel (%p84) target = $region20
        $region19: #{tpu_custom_call.1} parent=15 // pred_region
          %s87 = sand.u32 %s23, 1
          %s88 = scalar_lea.sflag [#allocation3], %s87
          %s89 = sand.u32 %s23, 1
          %s90 = smul.addr %s89, 64
          %s91 = scalar_lea.vmem [#allocation2], %s90
          %s92 = smul.u32 4, %s13
          %s94 = ssub.s32 1024, 1024
          %95 = vsyncadd %s88, %s94
          %s96 = smul.addr %s92, 2
          %s97 = smul.addr %s96, 128
          %s98 = scalar_lea.hbm %s0, %s97
          %s99 = sshll.u32 %s91, 4
          %s100 = int_to_ptr.vmem [resolvable:$true] %s99
          %105 = dma.hbm_to_vmem [thread:$0]  %s98, 1024, %s100, %s88, 128, 128, 8
        $region20: #{tpu_custom_call.1} parent=15 // pred_fallthru
          _
      $region16: #{tpu_custom_call.1} parent=5 // pred_fallthru
        _
      %p106 = scmp.le.s32.totalorder 1, %s13
      %p107 = scmp.lt.s32.totalorder %s13, 3
      %p108 = pnand %p106, %p107
      %p109 = pneg %p108
      // Predicated region
      $region21: #{tpu_custom_call.1} parent=5 // pred_check
        _
      $region22: #{tpu_custom_call.1} parent=5 // pred_check_branch
        %111 = sbr.rel (%p108) target = $region24
      $region23: #{tpu_custom_call.1} parent=5 // pred_region
        %s112 = ssub.s32 %s13, 1
        %s113 = sand.u32 %s26, 1
        %s114 = scalar_lea.sflag [#allocation3], %s113
        %s115 = sand.u32 %s26, 1
        %s116 = smul.addr %s115, 64
        %s117 = scalar_lea.vmem [#allocation2], %s116
        // Predicated region
        $region25: #{tpu_custom_call.1} parent=23 // pred_check
          %p118 = pneg %p39
        $region26: #{tpu_custom_call.1} parent=23 // pred_check_branch
          %120 = sbr.rel (%p118) target = $region28
        $region27: #{tpu_custom_call.1} parent=23 // pred_region
          %121 = dma.done %s114, 1024
        $region28: #{tpu_custom_call.1} parent=23 // pred_fallthru
          _
        %s122 = sand.u32 %s26, 1
        %s123 = scalar_lea.sflag [#allocation3], %s122
        %s124 = sand.u32 %s26, 1
        %s125 = smul.addr %s124, 64
        %s126 = scalar_lea.vmem [#allocation2], %s125
        %p127 = pneg %p39
        %p128 = pneg %p36
        %p129 = pneg %p65
        %p130 = pneg %p62
        %s131 = sand.u32 %s52, 1
        %s132 = scalar_lea.sflag [#allocation4], %s131
        %s133 = sand.u32 %s52, 1
        %s134 = smul.addr %s133, 64
        %s135 = scalar_lea.vmem [#allocation5], %s134
        %s136 = smul.u32 4, %s18
        %s137 = smul.u32 4, %s18
        %v138 = vld [vmem:[%s117] sm:$0xff]
        %v139 = vld [vmem:[%s117 + $0x8] sm:$0xff]
        %v140 = vld [vmem:[%s117 + $0x10] sm:$0xff]
        %v141 = vld [vmem:[%s117 + $0x18] sm:$0xff]
        %v142 = vld [vmem:[%s117 + $0x20] sm:$0xff]
        %v143 = vld [vmem:[%s117 + $0x28] sm:$0xff]
        %v144 = vld [vmem:[%s117 + $0x30] sm:$0xff]
        %v145 = vld [vmem:[%s117 + $0x38] sm:$0xff]
        %vm146 = vcmask 130048
        %v147 = vsel %vm146, %v138, 0.0
        %v148 = vsel %vm146, %v139, 0.0
        %v149 = vadd.f32 %v147, %v148
        %v150 = vrot.slane %v149, 4
        %v151 = vadd.f32 %v149, %v150
        %v152 = vrot.slane %v151, 2
        %v153 = vadd.f32 %v151, %v152
        %v154 = vrot.slane %v153, 1
        %v155 = vadd.f32 %v153, %v154
        %v156 = vsel %vm146, %v140, 0.0
        %v157 = vsel %vm146, %v141, 0.0
        %v158 = vadd.f32 %v156, %v157
        %v159 = vrot.slane %v158, 4
        %v160 = vadd.f32 %v158, %v159
        %v161 = vrot.slane %v160, 2
        %v162 = vadd.f32 %v160, %v161
        %v163 = vrot.slane %v162, 1
        %v164 = vadd.f32 %v162, %v163
        %v165 = vsel %vm146, %v142, 0.0
        %v166 = vsel %vm146, %v143, 0.0
        %v167 = vadd.f32 %v165, %v166
        %v168 = vrot.slane %v167, 4
        %v169 = vadd.f32 %v167, %v168
        %v170 = vrot.slane %v169, 2
        %v171 = vadd.f32 %v169, %v170
        %v172 = vrot.slane %v171, 1
        %v173 = vadd.f32 %v171, %v172
        %v174 = vsel %vm146, %v144, 0.0
        %v175 = vsel %vm146, %v145, 0.0
        %v176 = vadd.f32 %v174, %v175
        %v177 = vrot.slane %v176, 4
        %v178 = vadd.f32 %v176, %v177
        %v179 = vrot.slane %v178, 2
        %v180 = vadd.f32 %v178, %v179
        %v181 = vrot.slane %v180, 1
        %v182 = vadd.f32 %v180, %v181
        %v183 = vrcp.pop 16.0
        %v184 = vmul.f32 %v155, %v183
        %v185 = vmul.f32 %v164, %v183
        %v186 = vmul.f32 %v173, %v183
        %v187 = vmul.f32 %v182, %v183
        %v188 = vsub.f32 %v138, %v184
        %v189 = vsub.f32 %v139, %v184
        %v190 = vsub.f32 %v140, %v185
        %v191 = vsub.f32 %v141, %v185
        %v192 = vsub.f32 %v142, %v186
        %v193 = vsub.f32 %v143, %v186
        %v194 = vsub.f32 %v144, %v187
        %v195 = vsub.f32 %v145, %v187
        %v196 = vmul.f32 %v188, %v188
        %v197 = vmul.f32 %v189, %v189
        %v198 = vmul.f32 %v190, %v190
        %v199 = vmul.f32 %v191, %v191
        %v200 = vmul.f32 %v192, %v192
        %v201 = vmul.f32 %v193, %v193
        %v202 = vmul.f32 %v194, %v194
        %v203 = vmul.f32 %v195, %v195
        %v204 = vsel %vm146, %v196, 0.0
        %v205 = vsel %vm146, %v197, 0.0
        %v206 = vadd.f32 %v204, %v205
        %v207 = vrot.slane %v206, 4
        %v208 = vadd.f32 %v206, %v207
        %v209 = vrot.slane %v208, 2
        %v210 = vadd.f32 %v208, %v209
        %v211 = vrot.slane %v210, 1
        %v212 = vadd.f32 %v210, %v211
        %v213 = vsel %vm146, %v198, 0.0
        %v214 = vsel %vm146, %v199, 0.0
        %v215 = vadd.f32 %v213, %v214
        %v216 = vrot.slane %v215, 4
        %v217 = vadd.f32 %v215, %v216
        %v218 = vrot.slane %v217, 2
        %v219 = vadd.f32 %v217, %v218
        %v220 = vrot.slane %v219, 1
        %v221 = vadd.f32 %v219, %v220
        %v222 = vsel %vm146, %v200, 0.0
        %v223 = vsel %vm146, %v201, 0.0
        %v224 = vadd.f32 %v222, %v223
        %v225 = vrot.slane %v224, 4
        %v226 = vadd.f32 %v224, %v225
        %v227 = vrot.slane %v226, 2
        %v228 = vadd.f32 %v226, %v227
        %v229 = vrot.slane %v228, 1
        %v230 = vadd.f32 %v228, %v229
        %v231 = vsel %vm146, %v202, 0.0
        %v232 = vsel %vm146, %v203, 0.0
        %v233 = vadd.f32 %v231, %v232
        %v234 = vrot.slane %v233, 4
        %v235 = vadd.f32 %v233, %v234
        %v236 = vrot.slane %v235, 2
        %v237 = vadd.f32 %v235, %v236
        %v238 = vrot.slane %v237, 1
        %v239 = vadd.f32 %v237, %v238
        %v240 = vrcp.pop 15.0
        %v241 = vmul.f32 %v212, %v240
        %v242 = vmul.f32 %v221, %v240
        %v243 = vmul.f32 %v230, %v240
        %v244 = vmul.f32 %v239, %v240
        %v245 = vrsqrt.pop %v241
        %v246 = vmul.f32 %v241, %v245
        %vm247 = vcmp.eq.f32.partialorder %v241, inf
        %v248 = vsel %vm247, %v241, %v246
        %vm249 = vcmp.eq.f32.partialorder %v241, 0.0
        %v250 = vand.u32 %v241, 2147483648
        %v251 = vsel %vm249, %v250, %v248
        %v252 = vrsqrt.pop %v242
        %v253 = vmul.f32 %v242, %v252
        %vm254 = vcmp.eq.f32.partialorder %v242, inf
        %v255 = vsel %vm254, %v242, %v253
        %vm256 = vcmp.eq.f32.partialorder %v242, 0.0
        %v257 = vand.u32 %v242, 2147483648
        %v258 = vsel %vm256, %v257, %v255
        %v259 = vrsqrt.pop %v243
        %v260 = vmul.f32 %v243, %v259
        %vm261 = vcmp.eq.f32.partialorder %v243, inf
        %v262 = vsel %vm261, %v243, %v260
        %vm263 = vcmp.eq.f32.partialorder %v243, 0.0
        %v264 = vand.u32 %v243, 2147483648
        %v265 = vsel %vm263, %v264, %v262
        %v266 = vrsqrt.pop %v244
        %v267 = vmul.f32 %v244, %v266
        %vm268 = vcmp.eq.f32.partialorder %v244, inf
        %v269 = vsel %vm268, %v244, %v267
        %vm270 = vcmp.eq.f32.partialorder %v244, 0.0
        %v271 = vand.u32 %v244, 2147483648
        %v272 = vsel %vm270, %v271, %v269
        %v273 = vadd.f32 %v251, 1e-10
        %v274 = vadd.f32 %v258, 1e-10
        %v275 = vadd.f32 %v265, 1e-10
        %v276 = vadd.f32 %v272, 1e-10
        %v277 = vrcp.pop %v273
        %v278 = vrcp.pop %v274
        %v279 = vrcp.pop %v275
        %v280 = vrcp.pop %v276
        %v281 = vmul.f32 %v188, %v277
        %v282 = vmul.f32 %v189, %v277
        %v283 = vmul.f32 %v190, %v278
        %v284 = vmul.f32 %v191, %v278
        %v285 = vmul.f32 %v192, %v279
        %v286 = vmul.f32 %v193, %v279
        %v287 = vmul.f32 %v194, %v280
        %v288 = vmul.f32 %v195, %v280
        %289 = vst.msk [vmem:[%s135] sm:$0xff] %vm146, %v281
        %290 = vst.msk [vmem:[%s135 + $0x8] sm:$0xff] %vm146, %v282
        %291 = vst.msk [vmem:[%s135 + $0x10] sm:$0xff] %vm146, %v283
        %292 = vst.msk [vmem:[%s135 + $0x18] sm:$0xff] %vm146, %v284
        %293 = vst.msk [vmem:[%s135 + $0x20] sm:$0xff] %vm146, %v285
        %294 = vst.msk [vmem:[%s135 + $0x28] sm:$0xff] %vm146, %v286
        %295 = vst.msk [vmem:[%s135 + $0x30] sm:$0xff] %vm146, %v287
        %296 = vst.msk [vmem:[%s135 + $0x38] sm:$0xff] %vm146, %v288
        %s297 = sand.u32 %s52, 1
        %s298 = scalar_lea.sflag [#allocation4], %s297
        %s299 = sand.u32 %s52, 1
        %s300 = smul.addr %s299, 64
        %s301 = scalar_lea.vmem [#allocation5], %s300
        // Predicated region
        $region29: #{tpu_custom_call.1} parent=23 // pred_check
          %p302 = pneg %p62
        $region30: #{tpu_custom_call.1} parent=23 // pred_check_branch
          %304 = sbr.rel (%p302) target = $region32
        $region31: #{tpu_custom_call.1} parent=23 // pred_region
          %s305 = smul.u32 4, %s18
          %s307 = ssub.s32 1024, 1024
          %308 = vsyncadd %s298, %s307
          %s309 = smul.addr %s305, 2
          %s310 = smul.addr %s309, 128
          %s311 = scalar_lea.hbm %s1, %s310
          %s312 = sshll.u32 %s301, 4
          %s313 = int_to_ptr.vmem [resolvable:$true] %s312
          %318 = dma.vmem_to_hbm [thread:$0]  %s313, 1024, %s311, %s298, 128, 128, 8
        $region32: #{tpu_custom_call.1} parent=23 // pred_fallthru
          _
      $region24: #{tpu_custom_call.1} parent=5 // pred_fallthru
        _
      %p319 = scmp.le.s32.totalorder 2, %s13
      // Predicated region
      $region33: #{tpu_custom_call.1} parent=5 // pred_check
        %p320 = pneg %p319
      $region34: #{tpu_custom_call.1} parent=5 // pred_check_branch
        %322 = sbr.rel (%p320) target = $region36
      $region35: #{tpu_custom_call.1} parent=5 // pred_region
        %s323 = ssub.s32 %s13, 2
        // Predicated region
        $region37: #{tpu_custom_call.1} parent=35 // pred_check
          %p324 = pneg %p68
        $region38: #{tpu_custom_call.1} parent=35 // pred_check_branch
          %326 = sbr.rel (%p324) target = $region40
        $region39: #{tpu_custom_call.1} parent=35 // pred_region
          %s327 = sand.u32 %s53, 1
          %s328 = scalar_lea.sflag [#allocation4], %s327
          %s329 = sand.u32 %s53, 1
          %s330 = smul.addr %s329, 64
          %s331 = scalar_lea.vmem [#allocation5], %s330
          %332 = dma.done %s328, 1024
        $region40: #{tpu_custom_call.1} parent=35 // pred_fallthru
          _
      $region36: #{tpu_custom_call.1} parent=5 // pred_fallthru
        _
    $region6: #{tpu_custom_call.1} parent=1 // loop_footer
      %s17 = sadd.s32 1, %s13
    $region7: #{tpu_custom_call.1} parent=1 // loop_footer_branch
      %12 = sbr.rel target = $region3
    $region8: #{tpu_custom_call.1} parent=1 // loop_exit
      _
    %333 = vsyncpa [#allocation3], 1
    %s334 = scalar_lea.sflag [#allocation3], 1
    %335 = vsyncpa %s334, 1
    %336 = vsyncpa [#allocation4], 1
    %s337 = scalar_lea.sflag [#allocation4], 1
    %338 = vsyncpa %s337, 1

</llo_original>
